<compile_context>
chip_gen: v7x
topology: tpu7x:2x2x1
jax: 0.10.0
libtpu: 0.0.40
codegen_flags: <defaults>
</compile_context>

<pallas_src>
import functools

import numpy as np
import jax
import jax.numpy as jnp
from jax.experimental import pallas as pl
from jax.experimental.pallas import tpu as pltpu

_LRU_ALPHA = 0.2
_KERNEL = 3
_PADDING = _KERNEL // 2


def _leaky_relu(x, alpha=_LRU_ALPHA):
    return jnp.where(x > 0, x, alpha * x)


def _fused_resblock_kernel(xp_ref, m1_ref, m2_ref, msk_ref, bias_ref, o_ref,
                           *, H, W, Cin, Cout, K):
    """Fused: leaky_relu -> conv1 -> leaky_relu -> (in-VMEM reflect pad) -> conv2 + 1x1 skip.

    xp_ref  : (H+2, (W+2)*Cin)  reflect-padded input, pixel-major / channel-minor on lanes
    m1_ref  : (K, (W+2)*Cin, W*Cout)   band (block-Toeplitz) matrices for conv1, one per dy
    m2_ref  : (K, (W+2)*Cout, W*Cout)  band matrices for conv2, one per dy
    msk_ref : (W*Cin, W*Cout)          block-diagonal matrix for the 1x1 skip conv
    bias_ref: (2, W*Cout)              row 0 = tiled b1, row 1 = tiled (b2 + bs)
    o_ref   : (H, W*Cout)              lane-dense output slab
    """
    f32 = jnp.float32
    xp = xp_ref[...].astype(f32)                         # (H+2, (W+2)*Cin)
    bias = bias_ref[...].astype(f32)                     # (2, W*Cout)

    # ---- stage 1: leaky_relu(x) -> conv1 (+b1) ----
    a1 = _leaky_relu(xp)
    y1 = bias[0:1, :]                                    # broadcasts to (H, W*Cout)
    for dy in range(K):
        y1 = y1 + jnp.dot(a1[dy:dy + H, :], m1_ref[dy].astype(f32),
                          preferred_element_type=f32)

    # ---- stage 2: leaky_relu(y1) -> reflect pad (in VMEM/vregs) -> conv2 (+b2) ----
    a2 = _leaky_relu(y1)                                 # (H, W*Cout)
    rows = jnp.concatenate([a2[1:2, :], a2, a2[H - 2:H - 1, :]], axis=0)   # (H+2, W*Cout)
    a2p = jnp.concatenate(
        [rows[:, Cout:2 * Cout], rows, rows[:, (W - 2) * Cout:(W - 1) * Cout]],
        axis=1)                                          # (H+2, (W+2)*Cout)
    acc = bias[1:2, :]                                   # b2 + bs, broadcasts
    for dy in range(K):
        acc = acc + jnp.dot(a2p[dy:dy + H, :], m2_ref[dy].astype(f32),
                            preferred_element_type=f32)

    # ---- skip path: 1x1 conv on the ORIGINAL (un-activated) x ----
    x_inner = xp[1:H + 1, Cin:(W + 1) * Cin]             # (H, W*Cin), un-padded x
    acc = acc + jnp.dot(x_inner, msk_ref[...].astype(f32), preferred_element_type=f32)

    o_ref[...] = acc.astype(o_ref.dtype)


def _band_matrices(w, cin, cout, W, K):
    """w: (K, K, cin, cout) HWIO -> (K, (W+2*P)*cin, W*cout) block-Toeplitz matrices.

    M[dy, p*cin + ci, x*cout + co] = w[dy, dx, ci, co] where p == x + dx, else 0.
    """
    Wp = W + 2 * _PADDING
    sel = (np.arange(Wp)[None, None, :] ==
           (np.arange(W)[None, :, None] + np.arange(K)[:, None, None])).astype(np.float32)
    # sel: (K=dx, W=x, Wp=p)
    m = jnp.einsum("exp,deio->dpixo", jnp.asarray(sel, w.dtype), w)   # (K, Wp, cin, W, cout)
    return m.reshape(K, Wp * cin, W * cout)


def residual_block(x, w1, b1, w2, b2, ws, bs):
    """x: (N, H, W, Cin) float32. w1/w2: HWIO 3x3, ws: (Cin, Cout) 1x1. Returns (N, H, W, Cout)."""
    N, H, W, Cin = x.shape
    Cout = w1.shape[-1]
    K, P = _KERNEL, _PADDING
    Hp, Wp = H + 2 * P, W + 2 * P

    # Reflect-pad the input once and flatten (pixel, channel) onto the lane axis.
    xp = jnp.pad(x, ((0, 0), (P, P), (P, P), (0, 0)), mode="reflect").reshape(N, Hp, Wp * Cin)

    # Weight preprocessing (block-Toeplitz / block-diagonal expansions, tiled biases).
    M1 = _band_matrices(w1, Cin, Cout, W, K)                        # (K, Wp*Cin,  W*Cout)
    M2 = _band_matrices(w2, Cout, Cout, W, K)                       # (K, Wp*Cout, W*Cout)
    Msk = jnp.kron(jnp.eye(W, dtype=ws.dtype), ws)                  # (W*Cin, W*Cout)
    bias = jnp.stack([jnp.tile(b1, W), jnp.tile(b2 + bs, W)], axis=0)  # (2, W*Cout)

    sq = pl.Squeezed()
    out2d = pl.pallas_call(
        functools.partial(_fused_resblock_kernel, H=H, W=W, Cin=Cin, Cout=Cout, K=K),
        out_shape=jax.ShapeDtypeStruct((N, H, W * Cout), x.dtype),
        grid=(N,),
        in_specs=[
            pl.BlockSpec((sq, Hp, Wp * Cin), lambda n: (n, 0, 0)),
            pl.BlockSpec((K, Wp * Cin, W * Cout), lambda n: (0, 0, 0)),
            pl.BlockSpec((K, Wp * Cout, W * Cout), lambda n: (0, 0, 0)),
            pl.BlockSpec((W * Cin, W * Cout), lambda n: (0, 0)),
            pl.BlockSpec((2, W * Cout), lambda n: (0, 0)),
        ],
        out_specs=pl.BlockSpec((sq, H, W * Cout), lambda n: (n, 0, 0)),
        compiler_params=pltpu.CompilerParams(dimension_semantics=("parallel",)),
    )(xp, M1, M2, Msk, bias)

    return out2d.reshape(N, H, W, Cout)


def _reference(x, w1, b1, w2, b2, ws, bs):
    """Pure-JAX reference matching the PyTorch forward (NHWC / HWIO)."""
    def conv(a, w, b, pad):
        if pad:
            a = jnp.pad(a, ((0, 0), (pad, pad), (pad, pad), (0, 0)), mode="reflect")
        y = jax.lax.conv_general_dilated(
            a, w, window_strides=(1, 1), padding="VALID",
            dimension_numbers=("NHWC", "HWIO", "NHWC"))
        return y + b
    out = conv(jax.nn.leaky_relu(x, _LRU_ALPHA), w1, b1, _PADDING)
    out = conv(jax.nn.leaky_relu(out, _LRU_ALPHA), w2, b2, _PADDING)
    skip = conv(x, ws[None, None, :, :], bs, 0)
    return out + skip


if __name__ == "__main__":
    N, H, W = 2, 16, 16
    Cin, Cout = 4, 8  # nf_in != nf_out -> 1x1-conv skip path

    key = jax.random.PRNGKey(0)
    kx, k1, k2, k3, k4, k5, k6 = jax.random.split(key, 7)

    x = jax.random.normal(kx, (N, H, W, Cin), jnp.float32)
    w1 = jax.random.normal(k1, (_KERNEL, _KERNEL, Cin, Cout), jnp.float32) * 0.2
    b1 = jax.random.normal(k2, (Cout,), jnp.float32) * 0.1
    w2 = jax.random.normal(k3, (_KERNEL, _KERNEL, Cout, Cout), jnp.float32) * 0.15
    b2 = jax.random.normal(k4, (Cout,), jnp.float32) * 0.1
    ws = jax.random.normal(k5, (Cin, Cout), jnp.float32) * 0.3
    bs = jax.random.normal(k6, (Cout,), jnp.float32) * 0.1

    out = jax.jit(residual_block)(x, w1, b1, w2, b2, ws, bs)
    out = jax.block_until_ready(out)

    ref = _reference(x, w1, b1, w2, b2, ws, bs)
    assert out.shape == (N, H, W, Cout)
    assert jnp.allclose(out, ref, atol=2e-4, rtol=2e-4), "mismatch vs reference"

    # TODO(synk): spectral_norm / batch_norm branches and the stride>1 AvgPool skip path are
    # disabled in this config (stride=1, both flags False) and therefore not implemented.
    print("KERNEL_OK")
</pallas_src>

<mosaic_0001>
module attributes {stable_mosaic.version = 11 : i64} {
  func.func @_fused_resblock_kernel(%arg0: i32, %arg1: memref<1x18x72xf32, #tpu.memory_space<vmem>>, %arg2: memref<3x72x128xf32, #tpu.memory_space<vmem>>, %arg3: memref<3x144x128xf32, #tpu.memory_space<vmem>>, %arg4: memref<64x128xf32, #tpu.memory_space<vmem>>, %arg5: memref<2x128xf32, #tpu.memory_space<vmem>>, %arg6: memref<1x16x128xf32, #tpu.memory_space<vmem>>) attributes {dimension_semantics = [#tpu.dimension_semantics<parallel>], iteration_bounds = array<i64: 2>, scalar_prefetch = 0 : i64, scratch_operands = 0 : i64, tpu.core_type = #tpu.core_type<tc>, window_params = [{transform_indices = @transform_0, window_bounds = array<i64: 1, 18, 72>}, {pipeline_mode = #tpu.pipeline_mode<synchronous>, transform_indices = @transform_1, window_bounds = array<i64: 3, 72, 128>}, {pipeline_mode = #tpu.pipeline_mode<synchronous>, transform_indices = @transform_2, window_bounds = array<i64: 3, 144, 128>}, {pipeline_mode = #tpu.pipeline_mode<synchronous>, transform_indices = @transform_3, window_bounds = array<i64: 64, 128>}, {pipeline_mode = #tpu.pipeline_mode<synchronous>, transform_indices = @transform_4, window_bounds = array<i64: 2, 128>}, {transform_indices = @transform_5, window_bounds = array<i64: 1, 16, 128>}]} {
    %c0 = arith.constant 0 : index
    %c0_0 = arith.constant 0 : index
    %c0_1 = arith.constant 0 : index
    %0 = vector.load %arg1[%c0, %c0_0, %c0_1] : memref<1x18x72xf32, #tpu.memory_space<vmem>>, vector<1x18x72xf32>
    %1 = vector.shape_cast %0 : vector<1x18x72xf32> to vector<18x72xf32>
    %c0_2 = arith.constant 0 : index
    %c0_3 = arith.constant 0 : index
    %2 = vector.load %arg5[%c0_2, %c0_3] : memref<2x128xf32, #tpu.memory_space<vmem>>, vector<2x128xf32>
    %cst = arith.constant 0.000000e+00 : f32
    %3 = vector.broadcast %cst : f32 to vector<18x72xf32>
    %4 = arith.cmpf ogt, %1, %3 : vector<18x72xf32>
    %cst_4 = arith.constant 2.000000e-01 : f32
    %5 = vector.broadcast %cst_4 : f32 to vector<18x72xf32>
    %6 = arith.mulf %5, %1 : vector<18x72xf32>
    %7 = arith.select %4, %1, %6 : vector<18x72xi1>, vector<18x72xf32>
    %8 = vector.extract_strided_slice %2 {offsets = [0, 0], sizes = [1, 128], strides = [1, 1]} : vector<2x128xf32> to vector<1x128xf32>
    %9 = vector.extract_strided_slice %7 {offsets = [0, 0], sizes = [16, 72], strides = [1, 1]} : vector<18x72xf32> to vector<16x72xf32>
    %c0_5 = arith.constant 0 : index
    %c0_6 = arith.constant 0 : index
    %c0_7 = arith.constant 0 : index
    %10 = vector.load %arg2[%c0_5, %c0_6, %c0_7] : memref<3x72x128xf32, #tpu.memory_space<vmem>>, vector<1x72x128xf32>
    %11 = vector.shape_cast %10 : vector<1x72x128xf32> to vector<72x128xf32>
    %cst_8 = arith.constant dense<0.000000e+00> : vector<16x128xf32>
    %12 = tpu.matmul %9, %11, %cst_8 {dimension_numbers = #tpu.dot_dimension_numbers<[1], [0], [0], [1], [0, 0, 1, 1], [], []>} : vector<16x72xf32>, vector<72x128xf32>, vector<16x128xf32> -> vector<16x128xf32>
    %13 = vector.broadcast %8 : vector<1x128xf32> to vector<16x128xf32>
    %14 = arith.addf %13, %12 : vector<16x128xf32>
    %15 = vector.extract_strided_slice %7 {offsets = [1, 0], sizes = [16, 72], strides = [1, 1]} : vector<18x72xf32> to vector<16x72xf32>
    %c1 = arith.constant 1 : index
    %c0_9 = arith.constant 0 : index
    %c0_10 = arith.constant 0 : index
    %16 = vector.load %arg2[%c1, %c0_9, %c0_10] : memref<3x72x128xf32, #tpu.memory_space<vmem>>, vector<1x72x128xf32>
    %17 = vector.shape_cast %16 : vector<1x72x128xf32> to vector<72x128xf32>
    %cst_11 = arith.constant dense<0.000000e+00> : vector<16x128xf32>
    %18 = tpu.matmul %15, %17, %cst_11 {dimension_numbers = #tpu.dot_dimension_numbers<[1], [0], [0], [1], [0, 0, 1, 1], [], []>} : vector<16x72xf32>, vector<72x128xf32>, vector<16x128xf32> -> vector<16x128xf32>
    %19 = arith.addf %14, %18 : vector<16x128xf32>
    %20 = vector.extract_strided_slice %7 {offsets = [2, 0], sizes = [16, 72], strides = [1, 1]} : vector<18x72xf32> to vector<16x72xf32>
    %c2 = arith.constant 2 : index
    %c0_12 = arith.constant 0 : index
    %c0_13 = arith.constant 0 : index
    %21 = vector.load %arg2[%c2, %c0_12, %c0_13] : memref<3x72x128xf32, #tpu.memory_space<vmem>>, vector<1x72x128xf32>
    %22 = vector.shape_cast %21 : vector<1x72x128xf32> to vector<72x128xf32>
    %cst_14 = arith.constant dense<0.000000e+00> : vector<16x128xf32>
    %23 = tpu.matmul %20, %22, %cst_14 {dimension_numbers = #tpu.dot_dimension_numbers<[1], [0], [0], [1], [0, 0, 1, 1], [], []>} : vector<16x72xf32>, vector<72x128xf32>, vector<16x128xf32> -> vector<16x128xf32>
    %24 = arith.addf %19, %23 : vector<16x128xf32>
    %cst_15 = arith.constant 0.000000e+00 : f32
    %25 = vector.broadcast %cst_15 : f32 to vector<16x128xf32>
    %26 = arith.cmpf ogt, %24, %25 : vector<16x128xf32>
    %cst_16 = arith.constant 2.000000e-01 : f32
    %27 = vector.broadcast %cst_16 : f32 to vector<16x128xf32>
    %28 = arith.mulf %27, %24 : vector<16x128xf32>
    %29 = arith.select %26, %24, %28 : vector<16x128xi1>, vector<16x128xf32>
    %30 = vector.extract_strided_slice %29 {offsets = [1, 0], sizes = [1, 128], strides = [1, 1]} : vector<16x128xf32> to vector<1x128xf32>
    %31 = vector.extract_strided_slice %29 {offsets = [14, 0], sizes = [1, 128], strides = [1, 1]} : vector<16x128xf32> to vector<1x128xf32>
    %32 = tpu.concatenate %30, %29, %31 in 0 : vector<1x128xf32>, vector<16x128xf32>, vector<1x128xf32> -> vector<18x128xf32>
    %33 = vector.extract_strided_slice %32 {offsets = [0, 8], sizes = [18, 8], strides = [1, 1]} : vector<18x128xf32> to vector<18x8xf32>
    %34 = vector.extract_strided_slice %32 {offsets = [0, 112], sizes = [18, 8], strides = [1, 1]} : vector<18x128xf32> to vector<18x8xf32>
    %35 = tpu.concatenate %33, %32, %34 in 1 : vector<18x8xf32>, vector<18x128xf32>, vector<18x8xf32> -> vector<18x144xf32>
    %36 = vector.extract_strided_slice %2 {offsets = [1, 0], sizes = [1, 128], strides = [1, 1]} : vector<2x128xf32> to vector<1x128xf32>
    %37 = vector.extract_strided_slice %35 {offsets = [0, 0], sizes = [16, 144], strides = [1, 1]} : vector<18x144xf32> to vector<16x144xf32>
    %c0_17 = arith.constant 0 : index
    %c0_18 = arith.constant 0 : index
    %c0_19 = arith.constant 0 : index
    %38 = vector.load %arg3[%c0_17, %c0_18, %c0_19] : memref<3x144x128xf32, #tpu.memory_space<vmem>>, vector<1x144x128xf32>
    %39 = vector.shape_cast %38 : vector<1x144x128xf32> to vector<144x128xf32>
    %cst_20 = arith.constant dense<0.000000e+00> : vector<16x128xf32>
    %40 = tpu.matmul %37, %39, %cst_20 {dimension_numbers = #tpu.dot_dimension_numbers<[1], [0], [0], [1], [0, 0, 1, 1], [], []>} : vector<16x144xf32>, vector<144x128xf32>, vector<16x128xf32> -> vector<16x128xf32>
    %41 = vector.broadcast %36 : vector<1x128xf32> to vector<16x128xf32>
    %42 = arith.addf %41, %40 : vector<16x128xf32>
    %43 = vector.extract_strided_slice %35 {offsets = [1, 0], sizes = [16, 144], strides = [1, 1]} : vector<18x144xf32> to vector<16x144xf32>
    %c1_21 = arith.constant 1 : index
    %c0_22 = arith.constant 0 : index
    %c0_23 = arith.constant 0 : index
    %44 = vector.load %arg3[%c1_21, %c0_22, %c0_23] : memref<3x144x128xf32, #tpu.memory_space<vmem>>, vector<1x144x128xf32>
    %45 = vector.shape_cast %44 : vector<1x144x128xf32> to vector<144x128xf32>
    %cst_24 = arith.constant dense<0.000000e+00> : vector<16x128xf32>
    %46 = tpu.matmul %43, %45, %cst_24 {dimension_numbers = #tpu.dot_dimension_numbers<[1], [0], [0], [1], [0, 0, 1, 1], [], []>} : vector<16x144xf32>, vector<144x128xf32>, vector<16x128xf32> -> vector<16x128xf32>
    %47 = arith.addf %42, %46 : vector<16x128xf32>
    %48 = vector.extract_strided_slice %35 {offsets = [2, 0], sizes = [16, 144], strides = [1, 1]} : vector<18x144xf32> to vector<16x144xf32>
    %c2_25 = arith.constant 2 : index
    %c0_26 = arith.constant 0 : index
    %c0_27 = arith.constant 0 : index
    %49 = vector.load %arg3[%c2_25, %c0_26, %c0_27] : memref<3x144x128xf32, #tpu.memory_space<vmem>>, vector<1x144x128xf32>
    %50 = vector.shape_cast %49 : vector<1x144x128xf32> to vector<144x128xf32>
    %cst_28 = arith.constant dense<0.000000e+00> : vector<16x128xf32>
    %51 = tpu.matmul %48, %50, %cst_28 {dimension_numbers = #tpu.dot_dimension_numbers<[1], [0], [0], [1], [0, 0, 1, 1], [], []>} : vector<16x144xf32>, vector<144x128xf32>, vector<16x128xf32> -> vector<16x128xf32>
    %52 = arith.addf %47, %51 : vector<16x128xf32>
    %53 = vector.extract_strided_slice %1 {offsets = [1, 4], sizes = [16, 64], strides = [1, 1]} : vector<18x72xf32> to vector<16x64xf32>
    %c0_29 = arith.constant 0 : index
    %c0_30 = arith.constant 0 : index
    %54 = vector.load %arg4[%c0_29, %c0_30] : memref<64x128xf32, #tpu.memory_space<vmem>>, vector<64x128xf32>
    %cst_31 = arith.constant dense<0.000000e+00> : vector<16x128xf32>
    %55 = tpu.matmul %53, %54, %cst_31 {dimension_numbers = #tpu.dot_dimension_numbers<[1], [0], [0], [1], [0, 0, 1, 1], [], []>} : vector<16x64xf32>, vector<64x128xf32>, vector<16x128xf32> -> vector<16x128xf32>
    %56 = arith.addf %52, %55 : vector<16x128xf32>
    %c0_32 = arith.constant 0 : index
    %c0_33 = arith.constant 0 : index
    %c0_34 = arith.constant 0 : index
    %57 = vector.load %arg6[%c0_32, %c0_33, %c0_34] : memref<1x16x128xf32, #tpu.memory_space<vmem>>, vector<1x16x128xf32>
    %58 = vector.shape_cast %57 : vector<1x16x128xf32> to vector<16x128xf32>
    %59 = vector.shape_cast %56 : vector<16x128xf32> to vector<1x16x128xf32>
    tpu.vector_store %arg6[%c0_32, %c0_33, %c0_34], %59 {strides = array<i32>} : memref<1x16x128xf32, #tpu.memory_space<vmem>>, vector<1x16x128xf32>,
    return
  }
  func.func @transform_0(%arg0: i32) -> (i32, i32, i32) {
    %c0_i32 = arith.constant 0 : i32
    %c0_i32_0 = arith.constant 0 : i32
    %c0_i32_1 = arith.constant 0 : i32
    return %arg0, %c0_i32, %c0_i32_0 : i32, i32, i32
  }
  func.func @transform_1(%arg0: i32) -> (i32, i32, i32) {
    %c0_i32 = arith.constant 0 : i32
    %c0_i32_0 = arith.constant 0 : i32
    %c0_i32_1 = arith.constant 0 : i32
    %c0_i32_2 = arith.constant 0 : i32
    return %c0_i32, %c0_i32_0, %c0_i32_1 : i32, i32, i32
  }
  func.func @transform_2(%arg0: i32) -> (i32, i32, i32) {
    %c0_i32 = arith.constant 0 : i32
    %c0_i32_0 = arith.constant 0 : i32
    %c0_i32_1 = arith.constant 0 : i32
    %c0_i32_2 = arith.constant 0 : i32
    return %c0_i32, %c0_i32_0, %c0_i32_1 : i32, i32, i32
  }
  func.func @transform_3(%arg0: i32) -> (i32, i32) {
    %c0_i32 = arith.constant 0 : i32
    %c0_i32_0 = arith.constant 0 : i32
    %c0_i32_1 = arith.constant 0 : i32
    return %c0_i32, %c0_i32_0 : i32, i32
  }
  func.func @transform_4(%arg0: i32) -> (i32, i32) {
    %c0_i32 = arith.constant 0 : i32
    %c0_i32_0 = arith.constant 0 : i32
    %c0_i32_1 = arith.constant 0 : i32
    return %c0_i32, %c0_i32_0 : i32, i32
  }
  func.func @transform_5(%arg0: i32) -> (i32, i32, i32) {
    %c0_i32 = arith.constant 0 : i32
    %c0_i32_0 = arith.constant 0 : i32
    %c0_i32_1 = arith.constant 0 : i32
    return %arg0, %c0_i32, %c0_i32_0 : i32, i32, i32
  }
}

</mosaic_0001>

<llo_original>
// kernel: tile.17
$region0: #{tile.17}
  #allocation0 [shape = 's32[1]{0}', space=sflag, size = 0x4, scoped, tag = 'scoped memory for tile.17']
  %s0 = inlined_call_operand.vmem [shape: f32[8], index: 0, kind: input, shape index: {}]
  %s1 = inlined_call_operand.vmem [shape: f32[16,8], index: 1, kind: output, shape index: {}]
  // Predicated region
  $region2: #{tile.17} parent=0 // pred_check
    _
  $region3: #{tile.17} parent=0 // pred_check_branch
    %3 = sbr.rel (0) target = $region5
  $region4: #{tile.17} parent=0 // pred_region
    _
  $region5: #{tile.17} parent=0 // pred_fallthru
    _
  %v4 = vld [vmem:[%s0] ss:$0 sm:$0xff]
  %5 = vst [vmem:[%s1] sm:$0xff] %v4
  %s6 = scalar_lea.vmem %s1, 8
  %7 = vst [vmem:[%s6] sm:$0xff] %v4

// kernel: tile.19
$region0: #{tile.19}
  %s0 = inlined_call_operand.vmem [shape: f32[16,8], index: 0, kind: input, shape index: {}]
  %s1 = inlined_call_operand.vmem [shape: f32[1,128], index: 1, kind: output, shape index: {}]
  $region1: #{tile.19} parent=0
    #allocation0 [shape = 'u8[4096]{0}', space=vmem, size = 0x1000, scoped, tag = 'scoped mem for output reshape']
    %v2 = vld [vmem:[%s0] sm:$0x1]
    %vm3 = vcmask 64512
    %4 = vst.msk [vmem:[#allocation0] sm:$0x1] %vm3, %v2
    %s5 = scalar_lea.vmem %s0, 15
    %v6 = vld [vmem:[%s5] sm:$0x1]
    %7 = vrot.lane.b32.xlu0 %v6, 120
    %v8 = vpop.permute.xlu0 %7
    %vm9 = vcmask 1048512
    %10 = vst.msk [vmem:[#allocation0] sm:$0x1] %vm9, %v8
    %s11 = scalar_lea.vmem %s0, 14
    %v12 = vld [vmem:[%s11] sm:$0x1]
    %13 = vrot.lane.b32.xlu0 %v12, 112
    %v14 = vpop.permute.xlu0 %13
    %vm15 = vcmask 982912
    %16 = vst.msk [vmem:[#allocation0] sm:$0x1] %vm15, %v14
    %s17 = scalar_lea.vmem %s0, 13
    %v18 = vld [vmem:[%s17] sm:$0x1]
    %19 = vrot.lane.b32.xlu0 %v18, 104
    %v20 = vpop.permute.xlu0 %19
    %vm21 = vcmask 917312
    %22 = vst.msk [vmem:[#allocation0] sm:$0x1] %vm21, %v20
    %s23 = scalar_lea.vmem %s0, 12
    %v24 = vld [vmem:[%s23] sm:$0x1]
    %25 = vrot.lane.b32.xlu0 %v24, 96
    %v26 = vpop.permute.xlu0 %25
    %vm27 = vcmask 851712
    %28 = vst.msk [vmem:[#allocation0] sm:$0x1] %vm27, %v26
    %s29 = scalar_lea.vmem %s0, 11
    %v30 = vld [vmem:[%s29] sm:$0x1]
    %31 = vrot.lane.b32.xlu0 %v30, 88
    %v32 = vpop.permute.xlu0 %31
    %vm33 = vcmask 786112
    %34 = vst.msk [vmem:[#allocation0] sm:$0x1] %vm33, %v32
    %s35 = scalar_lea.vmem %s0, 10
    %v36 = vld [vmem:[%s35] sm:$0x1]
    %37 = vrot.lane.b32.xlu0 %v36, 80
    %v38 = vpop.permute.xlu0 %37
    %vm39 = vcmask 720512
    %40 = vst.msk [vmem:[#allocation0] sm:$0x1] %vm39, %v38
    %s41 = scalar_lea.vmem %s0, 9
    %v42 = vld [vmem:[%s41] sm:$0x1]
    %43 = vrot.lane.b32.xlu0 %v42, 72
    %v44 = vpop.permute.xlu0 %43
    %vm45 = vcmask 654912
    %46 = vst.msk [vmem:[#allocation0] sm:$0x1] %vm45, %v44
    %s47 = scalar_lea.vmem %s0, 8
    %v48 = vld [vmem:[%s47] sm:$0x1]
    %49 = vrot.lane.b32.xlu0 %v48, 64
    %v50 = vpop.permute.xlu0 %49
    %vm51 = vcmask 589312
    %52 = vst.msk [vmem:[#allocation0] sm:$0x1] %vm51, %v50
    %s53 = scalar_lea.vmem %s0, 7
    %v54 = vld [vmem:[%s53] sm:$0x1]
    %55 = vrot.lane.b32.xlu0 %v54, 56
    %v56 = vpop.permute.xlu0 %55
    %vm57 = vcmask 523712
    %58 = vst.msk [vmem:[#allocation0] sm:$0x1] %vm57, %v56
    %s59 = scalar_lea.vmem %s0, 6
    %v60 = vld [vmem:[%s59] sm:$0x1]
    %61 = vrot.lane.b32.xlu0 %v60, 48
    %v62 = vpop.permute.xlu0 %61
    %vm63 = vcmask 458112
    %64 = vst.msk [vmem:[#allocation0] sm:$0x1] %vm63, %v62
    %s65 = scalar_lea.vmem %s0, 5
    %v66 = vld [vmem:[%s65] sm:$0x1]
    %67 = vrot.lane.b32.xlu0 %v66, 40
    %v68 = vpop.permute.xlu0 %67
    %vm69 = vcmask 392512
    %70 = vst.msk [vmem:[#allocation0] sm:$0x1] %vm69, %v68
    %s71 = scalar_lea.vmem %s0, 4
    %v72 = vld [vmem:[%s71] sm:$0x1]
    %73 = vrot.lane.b32.xlu0 %v72, 32
    %v74 = vpop.permute.xlu0 %73
    %vm75 = vcmask 326912
    %76 = vst.msk [vmem:[#allocation0] sm:$0x1] %vm75, %v74
    %s77 = scalar_lea.vmem %s0, 3
    %v78 = vld [vmem:[%s77] sm:$0x1]
    %79 = vrot.lane.b32.xlu0 %v78, 24
    %v80 = vpop.permute.xlu0 %79
    %vm81 = vcmask 261312
    %82 = vst.msk [vmem:[#allocation0] sm:$0x1] %vm81, %v80
    %s83 = scalar_lea.vmem %s0, 2
    %v84 = vld [vmem:[%s83] sm:$0x1]
    %85 = vrot.lane.b32.xlu0 %v84, 16
    %v86 = vpop.permute.xlu0 %85
    %vm87 = vcmask 195712
    %88 = vst.msk [vmem:[#allocation0] sm:$0x1] %vm87, %v86
    %s89 = scalar_lea.vmem %s0, 1
    %v90 = vld [vmem:[%s89] sm:$0x1]
    %91 = vrot.lane.b32.xlu0 %v90, 8
    %v92 = vpop.permute.xlu0 %91
    %vm93 = vcmask 130112
    %94 = vst.msk [vmem:[#allocation0] sm:$0x1] %vm93, %v92
    %s96 = sshllo.u32 0, 1
    %v98 = vld [vmem:[#allocation0] sm:%s96]
    %s99 = sshllo.u32 0, 1
    %100 = vst [vmem:[%s1] sm:%s99] %v98

// kernel: residual_block.1
$region0: #{residual_block.1}
  #allocation0 [shape = 'u32[]', space=smem, size = 0x4, offset = 0x4, fixed_abs, tag = 'smem constant byte address 0x4 - core index']
  #allocation1 [shape = 'u32[144,128]{1,0:T(1,128)}', space=vmem, size = 0x12000, scoped, tag = 'internal scratch']
  %s0 = inlined_call_operand.vmem [shape: f32[2,18,72], index: 0, kind: input, shape index: {}]
  %s1 = inlined_call_operand.vmem [shape: f32[3,72,128], index: 1, kind: input, shape index: {}]
  %s2 = inlined_call_operand.vmem [shape: f32[3,144,128], index: 2, kind: input, shape index: {}]
  %s3 = inlined_call_operand.vmem [shape: f32[64,128], index: 3, kind: input, shape index: {}]
  %s4 = inlined_call_operand.vmem [shape: f32[2,128], index: 4, kind: input, shape index: {}]
  %s5 = inlined_call_operand.vmem [shape: f32[2,16,128], index: 5, kind: output, shape index: {}]
  %s6 = sld [smem:[#allocation0]]
  $region53: #{residual_block.1} parent=0
    _
  %s8 = ssub.s32 1, %s6
  %s9 = scalar_select 0, %s8, %s6
  loop: start=0, step=1, limit=4
  $region2: #{residual_block.1} parent=0 // loop_pre_header
    _
  $region3: #{residual_block.1} parent=0 // loop_header
    %s11 = sphi 0, %s15
    %p12 = scmp.ge.s32.totalorder %s11, 4
    %s21 = sphi 0, %s23
    %s24 = sphi 0, %s21
    %s25 = sphi 0, %s24
    %s41 = sphi 0, %s25
    %s45 = sphi 0, %s45
    %s47 = sphi 0, %s45
    %s48 = sphi 0, %s47
    %s62 = sphi 0, %s48
    %s66 = sphi 0, %s66
    %s68 = sphi 0, %s66
    %s69 = sphi 0, %s68
    %s83 = sphi 0, %s69
    %s87 = sphi 0, %s87
    %s89 = sphi 0, %s87
    %s90 = sphi 0, %s89
    %s104 = sphi 0, %s90
    %s108 = sphi 0, %s108
    %s110 = sphi 0, %s108
    %s111 = sphi 0, %s110
    %s125 = sphi 0, %s111
    %s131 = sphi 0, %s133
    %s134 = sphi 0, %s131
    %s135 = sphi 0, %s134
    %s151 = sphi 0, %s135
  $region4: #{residual_block.1} parent=0 // loop_header_branch
    %14 = sbr.rel (%p12) target = $region8
  $region5: #{residual_block.1} parent=0 // loop_body
    %s16 = ssub.s32 %s11, 1
    %s17 = ssub.s32 %s11, 2
    %s18 = sadd.s32 %s11, 1
    %s19 = ssub.s32 %s11, %s18
    %p20 = scmp.eq.s32.totalorder %s19, 0
    %s22 = sadd.s32 %s21, 1
    %s23 = scalar_select %p20, %s21, %s22
    %p26 = pneg %p20
    %p27 = scmp.eq.s32.totalorder %s11, 1
    %p28 = por %p26, %p27
    %p29 = scmp.ne.s32.totalorder %s21, %s24
    %p30 = scmp.eq.s32.totalorder %s11, 0
    %p31 = por %p29, %p30
    %p32 = scmp.ne.s32.totalorder %s21, %s24
    %p33 = scmp.eq.s32.totalorder %s16, 1
    %p34 = por %p32, %p33
    %p35 = scmp.ne.s32.totalorder %s24, %s25
    %p36 = scmp.eq.s32.totalorder %s16, 0
    %p37 = por %p35, %p36
    %p38 = scmp.ne.s32.totalorder %s24, %s25
    %p39 = scmp.eq.s32.totalorder %s17, 1
    %p40 = por %p38, %p39
    %p42 = scmp.ne.s32.totalorder %s25, %s41
    %p43 = scmp.eq.s32.totalorder %s17, 0
    %p44 = por %p42, %p43
    %s46 = sadd.s32 %s45, 1
    %p49 = scmp.eq.s32.totalorder %s11, 1
    %p50 = scmp.ne.s32.totalorder %s45, %s47
    %p51 = scmp.eq.s32.totalorder %s11, 0
    %p52 = por %p50, %p51
    %p53 = scmp.ne.s32.totalorder %s45, %s47
    %p54 = scmp.eq.s32.totalorder %s16, 1
    %p55 = por %p53, %p54
    %p56 = scmp.ne.s32.totalorder %s47, %s48
    %p57 = scmp.eq.s32.totalorder %s16, 0
    %p58 = por %p56, %p57
    %p59 = scmp.ne.s32.totalorder %s47, %s48
    %p60 = scmp.eq.s32.totalorder %s17, 1
    %p61 = por %p59, %p60
    %p63 = scmp.ne.s32.totalorder %s48, %s62
    %p64 = scmp.eq.s32.totalorder %s17, 0
    %p65 = por %p63, %p64
    %s67 = sadd.s32 %s66, 1
    %p70 = scmp.eq.s32.totalorder %s11, 1
    %p71 = scmp.ne.s32.totalorder %s66, %s68
    %p72 = scmp.eq.s32.totalorder %s11, 0
    %p73 = por %p71, %p72
    %p74 = scmp.ne.s32.totalorder %s66, %s68
    %p75 = scmp.eq.s32.totalorder %s16, 1
    %p76 = por %p74, %p75
    %p77 = scmp.ne.s32.totalorder %s68, %s69
    %p78 = scmp.eq.s32.totalorder %s16, 0
    %p79 = por %p77, %p78
    %p80 = scmp.ne.s32.totalorder %s68, %s69
    %p81 = scmp.eq.s32.totalorder %s17, 1
    %p82 = por %p80, %p81
    %p84 = scmp.ne.s32.totalorder %s69, %s83
    %p85 = scmp.eq.s32.totalorder %s17, 0
    %p86 = por %p84, %p85
    %s88 = sadd.s32 %s87, 1
    %p91 = scmp.eq.s32.totalorder %s11, 1
    %p92 = scmp.ne.s32.totalorder %s87, %s89
    %p93 = scmp.eq.s32.totalorder %s11, 0
    %p94 = por %p92, %p93
    %p95 = scmp.ne.s32.totalorder %s87, %s89
    %p96 = scmp.eq.s32.totalorder %s16, 1
    %p97 = por %p95, %p96
    %p98 = scmp.ne.s32.totalorder %s89, %s90
    %p99 = scmp.eq.s32.totalorder %s16, 0
    %p100 = por %p98, %p99
    %p101 = scmp.ne.s32.totalorder %s89, %s90
    %p102 = scmp.eq.s32.totalorder %s17, 1
    %p103 = por %p101, %p102
    %p105 = scmp.ne.s32.totalorder %s90, %s104
    %p106 = scmp.eq.s32.totalorder %s17, 0
    %p107 = por %p105, %p106
    %s109 = sadd.s32 %s108, 1
    %p112 = scmp.eq.s32.totalorder %s11, 1
    %p113 = scmp.ne.s32.totalorder %s108, %s110
    %p114 = scmp.eq.s32.totalorder %s11, 0
    %p115 = por %p113, %p114
    %p116 = scmp.ne.s32.totalorder %s108, %s110
    %p117 = scmp.eq.s32.totalorder %s16, 1
    %p118 = por %p116, %p117
    %p119 = scmp.ne.s32.totalorder %s110, %s111
    %p120 = scmp.eq.s32.totalorder %s16, 0
    %p121 = por %p119, %p120
    %p122 = scmp.ne.s32.totalorder %s110, %s111
    %p123 = scmp.eq.s32.totalorder %s17, 1
    %p124 = por %p122, %p123
    %p126 = scmp.ne.s32.totalorder %s111, %s125
    %p127 = scmp.eq.s32.totalorder %s17, 0
    %p128 = por %p126, %p127
    %s129 = ssub.s32 %s11, %s18
    %p130 = scmp.eq.s32.totalorder %s129, 0
    %s132 = sadd.s32 %s131, 1
    %s133 = scalar_select %p130, %s131, %s132
    %p136 = pneg %p130
    %p137 = scmp.eq.s32.totalorder %s11, 1
    %p138 = por %p136, %p137
    %p139 = scmp.ne.s32.totalorder %s131, %s134
    %p140 = scmp.eq.s32.totalorder %s11, 0
    %p141 = por %p139, %p140
    %p142 = scmp.ne.s32.totalorder %s131, %s134
    %p143 = scmp.eq.s32.totalorder %s16, 1
    %p144 = por %p142, %p143
    %p145 = scmp.ne.s32.totalorder %s134, %s135
    %p146 = scmp.eq.s32.totalorder %s16, 0
    %p147 = por %p145, %p146
    %p148 = scmp.ne.s32.totalorder %s134, %s135
    %p149 = scmp.eq.s32.totalorder %s17, 1
    %p150 = por %p148, %p149
    %p152 = scmp.ne.s32.totalorder %s135, %s151
    %p153 = scmp.eq.s32.totalorder %s17, 0
    %p154 = por %p152, %p153
    %p155 = scmp.le.s32.totalorder 1, %s11
    %p156 = scmp.lt.s32.totalorder %s11, 3
    %p157 = pnand %p155, %p156
    %p158 = pneg %p157
    // Predicated region
    $region9: #{residual_block.1} parent=5 // pred_check
      _
    $region10: #{residual_block.1} parent=5 // pred_check_branch
      %160 = sbr.rel (%p157) target = $region12
    $region11: #{residual_block.1} parent=5 // pred_region
      %s161 = ssub.s32 %s11, 1
      // Predicated region
      $region13: #{residual_block.1} parent=11 // pred_check
        %p162 = pneg %p58
      $region14: #{residual_block.1} parent=11 // pred_check_branch
        %164 = sbr.rel (%p162) target = $region16
      $region15: #{residual_block.1} parent=11 // pred_region
        _
      $region16: #{residual_block.1} parent=11 // pred_fallthru
        _
      // Predicated region
      $region17: #{residual_block.1} parent=11 // pred_check
        %p165 = pneg %p79
      $region18: #{residual_block.1} parent=11 // pred_check_branch
        %167 = sbr.rel (%p165) target = $region20
      $region19: #{residual_block.1} parent=11 // pred_region
        _
      $region20: #{residual_block.1} parent=11 // pred_fallthru
        _
      // Predicated region
      $region21: #{residual_block.1} parent=11 // pred_check
        %p168 = pneg %p100
      $region22: #{residual_block.1} parent=11 // pred_check_branch
        %170 = sbr.rel (%p168) target = $region24
      $region23: #{residual_block.1} parent=11 // pred_region
        _
      $region24: #{residual_block.1} parent=11 // pred_fallthru
        _
      // Predicated region
      $region25: #{residual_block.1} parent=11 // pred_check
        %p171 = pneg %p121
      $region26: #{residual_block.1} parent=11 // pred_check_branch
        %173 = sbr.rel (%p171) target = $region28
      $region27: #{residual_block.1} parent=11 // pred_region
        _
      $region28: #{residual_block.1} parent=11 // pred_fallthru
        _
    $region12: #{residual_block.1} parent=5 // pred_fallthru
      _
    %p174 = scmp.lt.s32.totalorder %s11, 2
    // Predicated region
    $region29: #{residual_block.1} parent=5 // pred_check
      %p175 = pneg %p174
    $region30: #{residual_block.1} parent=5 // pred_check_branch
      %177 = sbr.rel (%p175) target = $region32
    $region31: #{residual_block.1} parent=5 // pred_region
      // Predicated region
      $region33: #{residual_block.1} parent=31 // pred_check
        %p178 = pneg %p31
      $region34: #{residual_block.1} parent=31 // pred_check_branch
        %180 = sbr.rel (%p178) target = $region36
      $region35: #{residual_block.1} parent=31 // pred_region
        %p181 = scmp.lt.s32.totalorder %s11, 1
        %s182 = scalar_select %p181, %s11, 1
        %s183 = smul.addr %s182, 3
        %s184 = smul.addr %s183, 8
        %s185 = scalar_lea.vmem %s0, %s184
      $region36: #{residual_block.1} parent=31 // pred_fallthru
        _
    $region32: #{residual_block.1} parent=5 // pred_fallthru
      _
    %p186 = scmp.le.s32.totalorder 1, %s11
    %p187 = scmp.lt.s32.totalorder %s11, 3
    %p188 = pnand %p186, %p187
    %p189 = pneg %p188
    // Predicated region
    $region37: #{residual_block.1} parent=5 // pred_check
      _
    $region38: #{residual_block.1} parent=5 // pred_check_branch
      %191 = sbr.rel (%p188) target = $region40
    $region39: #{residual_block.1} parent=5 // pred_region
      %s192 = ssub.s32 %s11, 1
      %p193 = scmp.lt.s32.totalorder %s16, 1
      %s194 = scalar_select %p193, %s16, 1
      %s195 = smul.addr %s194, 3
      %s196 = smul.addr %s195, 8
      %s197 = scalar_lea.vmem %s0, %s196
      %p198 = pneg %p37
      %p199 = pneg %p34
      %p200 = pneg %p58
      %p201 = pneg %p55
      %p202 = pneg %p79
      %p203 = pneg %p76
      %p204 = pneg %p100
      %p205 = pneg %p97
      %p206 = pneg %p121
      %p207 = pneg %p118
      %p208 = pneg %p147
      %p209 = pneg %p144
      %p210 = scmp.lt.s32.totalorder %s16, 1
      %s211 = scalar_select %p210, %s16, 1
      %s212 = smul.addr %s211, 2
      %s213 = smul.addr %s212, 8
      %s214 = scalar_lea.vmem %s5, %s213
      %p215 = scmp.lt.s32.totalorder %s16, 1
      %s216 = scalar_select %p215, %s16, 1
      %s217 = smul.addr %s216, 3
      %s218 = smul.addr %s217, 8
      %s219 = scalar_lea.vmem %s0, %s218
      %p220 = scmp.lt.s32.totalorder %s16, 1
      %s221 = scalar_select %p220, %s16, 1
      %s222 = smul.addr %s221, 2
      %s223 = smul.addr %s222, 8
      %s224 = scalar_lea.vmem %s5, %s223
      %v225 = vld [vmem:[%s219] sm:$0xff]
      %v226 = vld [vmem:[%s219 + $0x8] sm:$0xff]
      %v227 = vld [vmem:[%s219 + $0x10] sm:$0x3]
      %v228 = vld [vmem:[%s4] sm:$0x3]
      %vm229 = vcmp.gt.f32.partialorder %v225, 0.0
      %vm230 = vcmp.gt.f32.partialorder %v226, 0.0
      %vm231 = vcmp.gt.f32.partialorder %v227, 0.0
      %v232 = vmul.f32 %v225, 0.2
      %v233 = vmul.f32 %v226, 0.2
      %v234 = vmul.f32 %v227, 0.2
      %v235 = vsel %vm229, %v225, %v232
      %v236 = vsel %vm230, %v226, %v233
      %v237 = vsel %vm231, %v227, %v234
      %v238 = vld [vmem:[%s1] sm:$0xff]
      %v239 = vld [vmem:[%s1 + $0x8] sm:$0xff]
      %v240 = vld [vmem:[%s1 + $0x10] sm:$0xff]
      %v241 = vld [vmem:[%s1 + $0x18] sm:$0xff]
      %v242 = vld [vmem:[%s1 + $0x20] sm:$0xff]
      %v243 = vld [vmem:[%s1 + $0x28] sm:$0xff]
      %v244 = vld [vmem:[%s1 + $0x30] sm:$0xff]
      %v245 = vld [vmem:[%s1 + $0x38] sm:$0xff]
      %v246 = vld [vmem:[%s1 + $0x40] sm:$0xff]
      %vm247 = vcmask 588800
      %v249 = vsel %vm247, %v235, 0
      %v252 = vsel %vm247, %v236, 0
      %254 = vmatprep.subr.mxu0 0.0
      %255 = vmatpush1.msra.mxu0 %v238
      %256 = vmatprep.subr.mxu0 0.0
      %257 = vmatpush1.msra.mxu0 %v239
      %258 = vmatprep.subr.mxu0 0.0
      %259 = vmatpush1.msra.mxu0 %v240
      %260 = vmatprep.subr.mxu0 0.0
      %261 = vmatpush1.msra.mxu0 %v241
      %262 = vmatprep.subr.mxu0 0.0
      %263 = vmatpush1.msra.mxu0 %v242
      %264 = vmatprep.subr.mxu0 0.0
      %265 = vmatpush1.msra.mxu0 %v243
      %266 = vmatprep.subr.mxu0 0.0
      %267 = vmatpush1.msra.mxu0 %v244
      %268 = vmatprep.subr.mxu0 0.0
      %269 = vmatpush1.msra.mxu0 %v245
      %270 = vmatprep.subr.mxu0 0.0
      %271 = vmatpush1.msra.mxu0 %v246
      %272 = vmatprep.subr.mxu0 0.0
      %273 = vmatpush1.msra.mxu0 0.0
      %274 = vmatprep.subr.mxu0 0.0
      %275 = vmatpush1.msra.mxu0 0.0
      %276 = vmatprep.subr.mxu0 0.0
      %277 = vmatpush1.msra.mxu0 0.0
      %278 = vmatprep.subr.mxu0 0.0
      %279 = vmatpush1.msra.mxu0 0.0
      %280 = vmatprep.subr.mxu0 0.0
      %281 = vmatpush1.msra.mxu0 0.0
      %282 = vmatprep.subr.mxu0 0.0
      %283 = vmatpush1.msra.mxu0 0.0
      %284 = vmatprep.subr.mxu0 0.0
      %285 = vmatpush1.msra.mxu0 0.0
      %286 = vmatprep.subr.mxu0 0.0
      %287 = vmatpush1.msra.mxu0 0.0
      %288 = vmatprep.subr.mxu0 0.0
      %289 = vmatpush1.msra.mxu0 0.0
      %290 = vmatprep.subr.mxu0 0.0
      %291 = vmatpush1.msra.mxu0 0.0
      %292 = vmatprep.subr.mxu0 0.0
      %293 = vmatpush1.msra.mxu0 0.0
      %294 = vmatprep.subr.mxu0 0.0
      %295 = vmatpush1.msra.mxu0 0.0
      %296 = vmatprep.subr.mxu0 0.0
      %297 = vmatpush1.msra.mxu0 0.0
      %298 = vmatprep.subr.mxu0 0.0
      %299 = vmatpush1.msra.mxu0 0.0
      %300 = vmatprep.subr.mxu0 0.0
      %301 = vmatpush1.msra.mxu0 0.0
      %302 = vmatprep.subr.mxu0 0.0
      %303 = vmatpush1.msra.mxu0 0.0
      %304 = vmatprep.subr.mxu0 0.0
      %305 = vmatpush1.msra.mxu0 0.0
      %306 = vmatprep.subr.mxu0 0.0
      %307 = vmatpush1.msra.mxu0 0.0
      %308 = vmatprep.subr.mxu0 0.0
      %309 = vmatpush1.msra.mxu0 0.0
      %310 = vmatprep.subr.mxu0 0.0
      %311 = vmatpush1.msra.mxu0 0.0
      %312 = vmatprep.subr.mxu0 0.0
      %313 = vmatpush1.msra.mxu0 0.0
      %314 = vmatprep.subr.mxu0 0.0
      %315 = vmatpush1.msra.mxu0 0.0
      %316 = vmatprep.subr.mxu0 0.0
      %317 = vmatpush1.msra.mxu0 0.0
      %318 = vmatprep.mubr.f32.mxu0 0.0
      %319 = vmatmul.mubr.f32.gmra.mrb[0].mxu0 %v249
      %v320 = vpop.f32.mrb[0].mxu0
      %v321 = vadd.f32 0.0, %v320
      %v322 = vpop.f32.mrb[0].mxu0
      %323 = vmatprep.mubr.f32.mxu0 0.0
      %324 = vmatmul.mubr.f32.gmra.mrb[0].mxu0 %v252
      %v325 = vpop.f32.mrb[0].mxu0
      %v326 = vadd.f32 0.0, %v325
      %v327 = vpop.f32.mrb[0].mxu0
      %328 = vdwg.mxu0
      %v329 = vlaneseq
      %v330 = vshrl.u32 %v329, 7
      %v331 = vsub.s32 0, %v330
      %v332 = vrot.slane %v228, %v331
      %v333 = vadd.f32 %v332, %v321
      %v334 = vadd.f32 %v332, %v326
      %s335 = scalar_lea.vmem %s1, 72
      %v336 = vld [vmem:[%s335] sm:$0xff]
      %v337 = vld [vmem:[%s335 + $0x8] sm:$0xff]
      %v338 = vld [vmem:[%s335 + $0x10] sm:$0xff]
      %v339 = vld [vmem:[%s335 + $0x18] sm:$0xff]
      %v340 = vld [vmem:[%s335 + $0x20] sm:$0xff]
      %v341 = vld [vmem:[%s335 + $0x28] sm:$0xff]
      %v342 = vld [vmem:[%s335 + $0x30] sm:$0xff]
      %v343 = vld [vmem:[%s335 + $0x38] sm:$0xff]
      %v344 = vld [vmem:[%s335 + $0x40] sm:$0xff]
      %vm346 = vcmask 1046528
      %v347 = vrot.slane %v235, 1
      %v348 = vrot.slane %v236, 1
      %v349 = vsel %vm346, %v347, %v348
      %v350 = vrot.slane %v237, 1
      %v351 = vsel %vm346, %v348, %v350
      %v352 = vsel %vm247, %v349, 0
      %v354 = vsel %vm247, %v351, 0
      %356 = vmatprep.subr.mxu0 0.0
      %357 = vmatpush1.msra.mxu0 %v336
      %358 = vmatprep.subr.mxu0 0.0
      %359 = vmatpush1.msra.mxu0 %v337
      %360 = vmatprep.subr.mxu0 0.0
      %361 = vmatpush1.msra.mxu0 %v338
      %362 = vmatprep.subr.mxu0 0.0
      %363 = vmatpush1.msra.mxu0 %v339
      %364 = vmatprep.subr.mxu0 0.0
      %365 = vmatpush1.msra.mxu0 %v340
      %366 = vmatprep.subr.mxu0 0.0
      %367 = vmatpush1.msra.mxu0 %v341
      %368 = vmatprep.subr.mxu0 0.0
      %369 = vmatpush1.msra.mxu0 %v342
      %370 = vmatprep.subr.mxu0 0.0
      %371 = vmatpush1.msra.mxu0 %v343
      %372 = vmatprep.subr.mxu0 0.0
      %373 = vmatpush1.msra.mxu0 %v344
      %374 = vmatprep.subr.mxu0 0.0
      %375 = vmatpush1.msra.mxu0 0.0
      %376 = vmatprep.subr.mxu0 0.0
      %377 = vmatpush1.msra.mxu0 0.0
      %378 = vmatprep.subr.mxu0 0.0
      %379 = vmatpush1.msra.mxu0 0.0
      %380 = vmatprep.subr.mxu0 0.0
      %381 = vmatpush1.msra.mxu0 0.0
      %382 = vmatprep.subr.mxu0 0.0
      %383 = vmatpush1.msra.mxu0 0.0
      %384 = vmatprep.subr.mxu0 0.0
      %385 = vmatpush1.msra.mxu0 0.0
      %386 = vmatprep.subr.mxu0 0.0
      %387 = vmatpush1.msra.mxu0 0.0
      %388 = vmatprep.subr.mxu0 0.0
      %389 = vmatpush1.msra.mxu0 0.0
      %390 = vmatprep.subr.mxu0 0.0
      %391 = vmatpush1.msra.mxu0 0.0
      %392 = vmatprep.subr.mxu0 0.0
      %393 = vmatpush1.msra.mxu0 0.0
      %394 = vmatprep.subr.mxu0 0.0
      %395 = vmatpush1.msra.mxu0 0.0
      %396 = vmatprep.subr.mxu0 0.0
      %397 = vmatpush1.msra.mxu0 0.0
      %398 = vmatprep.subr.mxu0 0.0
      %399 = vmatpush1.msra.mxu0 0.0
      %400 = vmatprep.subr.mxu0 0.0
      %401 = vmatpush1.msra.mxu0 0.0
      %402 = vmatprep.subr.mxu0 0.0
      %403 = vmatpush1.msra.mxu0 0.0
      %404 = vmatprep.subr.mxu0 0.0
      %405 = vmatpush1.msra.mxu0 0.0
      %406 = vmatprep.subr.mxu0 0.0
      %407 = vmatpush1.msra.mxu0 0.0
      %408 = vmatprep.subr.mxu0 0.0
      %409 = vmatpush1.msra.mxu0 0.0
      %410 = vmatprep.subr.mxu0 0.0
      %411 = vmatpush1.msra.mxu0 0.0
      %412 = vmatprep.subr.mxu0 0.0
      %413 = vmatpush1.msra.mxu0 0.0
      %414 = vmatprep.subr.mxu0 0.0
      %415 = vmatpush1.msra.mxu0 0.0
      %416 = vmatprep.subr.mxu0 0.0
      %417 = vmatpush1.msra.mxu0 0.0
      %418 = vmatprep.subr.mxu0 0.0
      %419 = vmatpush1.msra.mxu0 0.0
      %420 = vmatprep.mubr.f32.mxu0 0.0
      %421 = vmatmul.mubr.f32.gmra.mrb[0].mxu0 %v352
      %v422 = vpop.f32.mrb[0].mxu0
      %v423 = vadd.f32 0.0, %v422
      %v424 = vpop.f32.mrb[0].mxu0
      %425 = vmatprep.mubr.f32.mxu0 0.0
      %426 = vmatmul.mubr.f32.gmra.mrb[0].mxu0 %v354
      %v427 = vpop.f32.mrb[0].mxu0
      %v428 = vadd.f32 0.0, %v427
      %v429 = vpop.f32.mrb[0].mxu0
      %430 = vdwg.mxu0
      %v431 = vadd.f32 %v333, %v423
      %v432 = vadd.f32 %v334, %v428
      %s433 = scalar_lea.vmem %s1, 144
      %v434 = vld [vmem:[%s433] sm:$0xff]
      %v435 = vld [vmem:[%s433 + $0x8] sm:$0xff]
      %v436 = vld [vmem:[%s433 + $0x10] sm:$0xff]
      %v437 = vld [vmem:[%s433 + $0x18] sm:$0xff]
      %v438 = vld [vmem:[%s433 + $0x20] sm:$0xff]
      %v439 = vld [vmem:[%s433 + $0x28] sm:$0xff]
      %v440 = vld [vmem:[%s433 + $0x30] sm:$0xff]
      %v441 = vld [vmem:[%s433 + $0x38] sm:$0xff]
      %v442 = vld [vmem:[%s433 + $0x40] sm:$0xff]
      %vm443 = vcmask 1045504
      %v444 = vrot.slane %v235, 2
      %v445 = vrot.slane %v236, 2
      %v446 = vsel %vm443, %v444, %v445
      %v447 = vrot.slane %v237, 2
      %v448 = vsel %vm443, %v445, %v447
      %v449 = vsel %vm247, %v446, 0
      %v451 = vsel %vm247, %v448, 0
      %453 = vmatprep.subr.mxu0 0.0
      %454 = vmatpush1.msra.mxu0 %v434
      %455 = vmatprep.subr.mxu0 0.0
      %456 = vmatpush1.msra.mxu0 %v435
      %457 = vmatprep.subr.mxu0 0.0
      %458 = vmatpush1.msra.mxu0 %v436
      %459 = vmatprep.subr.mxu0 0.0
      %460 = vmatpush1.msra.mxu0 %v437
      %461 = vmatprep.subr.mxu0 0.0
      %462 = vmatpush1.msra.mxu0 %v438
      %463 = vmatprep.subr.mxu0 0.0
      %464 = vmatpush1.msra.mxu0 %v439
      %465 = vmatprep.subr.mxu0 0.0
      %466 = vmatpush1.msra.mxu0 %v440
      %467 = vmatprep.subr.mxu0 0.0
      %468 = vmatpush1.msra.mxu0 %v441
      %469 = vmatprep.subr.mxu0 0.0
      %470 = vmatpush1.msra.mxu0 %v442
      %471 = vmatprep.subr.mxu0 0.0
      %472 = vmatpush1.msra.mxu0 0.0
      %473 = vmatprep.subr.mxu0 0.0
      %474 = vmatpush1.msra.mxu0 0.0
      %475 = vmatprep.subr.mxu0 0.0
      %476 = vmatpush1.msra.mxu0 0.0
      %477 = vmatprep.subr.mxu0 0.0
      %478 = vmatpush1.msra.mxu0 0.0
      %479 = vmatprep.subr.mxu0 0.0
      %480 = vmatpush1.msra.mxu0 0.0
      %481 = vmatprep.subr.mxu0 0.0
      %482 = vmatpush1.msra.mxu0 0.0
      %483 = vmatprep.subr.mxu0 0.0
      %484 = vmatpush1.msra.mxu0 0.0
      %485 = vmatprep.subr.mxu0 0.0
      %486 = vmatpush1.msra.mxu0 0.0
      %487 = vmatprep.subr.mxu0 0.0
      %488 = vmatpush1.msra.mxu0 0.0
      %489 = vmatprep.subr.mxu0 0.0
      %490 = vmatpush1.msra.mxu0 0.0
      %491 = vmatprep.subr.mxu0 0.0
      %492 = vmatpush1.msra.mxu0 0.0
      %493 = vmatprep.subr.mxu0 0.0
      %494 = vmatpush1.msra.mxu0 0.0
      %495 = vmatprep.subr.mxu0 0.0
      %496 = vmatpush1.msra.mxu0 0.0
      %497 = vmatprep.subr.mxu0 0.0
      %498 = vmatpush1.msra.mxu0 0.0
      %499 = vmatprep.subr.mxu0 0.0
      %500 = vmatpush1.msra.mxu0 0.0
      %501 = vmatprep.subr.mxu0 0.0
      %502 = vmatpush1.msra.mxu0 0.0
      %503 = vmatprep.subr.mxu0 0.0
      %504 = vmatpush1.msra.mxu0 0.0
      %505 = vmatprep.subr.mxu0 0.0
      %506 = vmatpush1.msra.mxu0 0.0
      %507 = vmatprep.subr.mxu0 0.0
      %508 = vmatpush1.msra.mxu0 0.0
      %509 = vmatprep.subr.mxu0 0.0
      %510 = vmatpush1.msra.mxu0 0.0
      %511 = vmatprep.subr.mxu0 0.0
      %512 = vmatpush1.msra.mxu0 0.0
      %513 = vmatprep.subr.mxu0 0.0
      %514 = vmatpush1.msra.mxu0 0.0
      %515 = vmatprep.subr.mxu0 0.0
      %516 = vmatpush1.msra.mxu0 0.0
      %517 = vmatprep.mubr.f32.mxu0 0.0
      %518 = vmatmul.mubr.f32.gmra.mrb[0].mxu0 %v449
      %v519 = vpop.f32.mrb[0].mxu0
      %v520 = vadd.f32 0.0, %v519
      %v521 = vpop.f32.mrb[0].mxu0
      %522 = vmatprep.mubr.f32.mxu0 0.0
      %523 = vmatmul.mubr.f32.gmra.mrb[0].mxu0 %v451
      %v524 = vpop.f32.mrb[0].mxu0
      %v525 = vadd.f32 0.0, %v524
      %v526 = vpop.f32.mrb[0].mxu0
      %527 = vdwg.mxu0
      %v528 = vadd.f32 %v431, %v520
      %v529 = vadd.f32 %v432, %v525
      %vm530 = vcmp.gt.f32.partialorder %v528, 0.0
      %vm531 = vcmp.gt.f32.partialorder %v529, 0.0
      %v532 = vmul.f32 %v528, 0.2
      %v533 = vmul.f32 %v529, 0.2
      %v534 = vsel %vm530, %v528, %v532
      %v535 = vsel %vm531, %v529, %v533
      %v537 = vrot.slane %v534, 1
      %vm540 = vcmask 1040384
      %v541 = vrot.slane %v534, 7
      %v542 = vrot.slane %v535, 7
      %v543 = vsel %vm540, %v541, %v542
      %v546 = vrot.slane %v535, 5
      %v548 = vsel %vm540, %v537, %v541
      %v549 = vsel %vm540, %v542, %v546
      %552 = vrot.lane.b32.xlu0 %v548, 120
      %v553 = vpop.permute.xlu0 %552
      %554 = vrot.lane.b32.xlu0 %v543, 120
      %v555 = vpop.permute.xlu0 %554
      %556 = vrot.lane.b32.xlu0 %v549, 120
      %v557 = vpop.permute.xlu0 %556
      %561 = vrot.lane.b32.xlu0 %v548, 8
      %v562 = vpop.permute.xlu0 %561
      %563 = vrot.lane.b32.xlu0 %v543, 8
      %v564 = vpop.permute.xlu0 %563
      %565 = vrot.lane.b32.xlu0 %v549, 8
      %v566 = vpop.permute.xlu0 %565
      %570 = vrot.lane.b32.xlu0 %v548, 24
      %v571 = vpop.permute.xlu0 %570
      %572 = vrot.lane.b32.xlu0 %v543, 24
      %v573 = vpop.permute.xlu0 %572
      %574 = vrot.lane.b32.xlu0 %v549, 24
      %v575 = vpop.permute.xlu0 %574
      %vm579 = vcmask 64512
      %v580 = vsel %vm579, %v553, %v562
      %v581 = vsel %vm579, %v555, %v564
      %v582 = vsel %vm579, %v557, %v566
      %v583 = vsel %vm579, %v562, %v571
      %v584 = vsel %vm579, %v564, %v573
      %v585 = vsel %vm579, %v566, %v575
      %v586 = vld [vmem:[%s2] sm:$0xff]
      %v587 = vld [vmem:[%s2 + $0x8] sm:$0xff]
      %v588 = vld [vmem:[%s2 + $0x10] sm:$0xff]
      %v589 = vld [vmem:[%s2 + $0x18] sm:$0xff]
      %v590 = vld [vmem:[%s2 + $0x20] sm:$0xff]
      %v591 = vld [vmem:[%s2 + $0x28] sm:$0xff]
      %v592 = vld [vmem:[%s2 + $0x30] sm:$0xff]
      %v593 = vld [vmem:[%s2 + $0x38] sm:$0xff]
      %v594 = vld [vmem:[%s2 + $0x40] sm:$0xff]
      %v595 = vld [vmem:[%s2 + $0x48] sm:$0xff]
      %v596 = vld [vmem:[%s2 + $0x50] sm:$0xff]
      %v597 = vld [vmem:[%s2 + $0x58] sm:$0xff]
      %v598 = vld [vmem:[%s2 + $0x60] sm:$0xff]
      %v599 = vld [vmem:[%s2 + $0x68] sm:$0xff]
      %v600 = vld [vmem:[%s2 + $0x70] sm:$0xff]
      %v601 = vld [vmem:[%s2 + $0x78] sm:$0xff]
      %v602 = vld [vmem:[%s2 + $0x80] sm:$0xff]
      %v603 = vld [vmem:[%s2 + $0x88] sm:$0xff]
      %vm604 = vcmask 130048
      %v606 = vsel %vm604, %v583, 0
      %v609 = vsel %vm604, %v584, 0
      %611 = vmatprep.subr.mxu0 0.0
      %612 = vmatpush1.msra.mxu0 %v586
      %613 = vmatprep.subr.mxu0 0.0
      %614 = vmatpush1.msra.mxu0 %v587
      %615 = vmatprep.subr.mxu0 0.0
      %616 = vmatpush1.msra.mxu0 %v588
      %617 = vmatprep.subr.mxu0 0.0
      %618 = vmatpush1.msra.mxu0 %v589
      %619 = vmatprep.subr.mxu0 0.0
      %620 = vmatpush1.msra.mxu0 %v590
      %621 = vmatprep.subr.mxu0 0.0
      %622 = vmatpush1.msra.mxu0 %v591
      %623 = vmatprep.subr.mxu0 0.0
      %624 = vmatpush1.msra.mxu0 %v592
      %625 = vmatprep.subr.mxu0 0.0
      %626 = vmatpush1.msra.mxu0 %v593
      %627 = vmatprep.subr.mxu0 0.0
      %628 = vmatpush1.msra.mxu0 %v594
      %629 = vmatprep.subr.mxu0 0.0
      %630 = vmatpush1.msra.mxu0 %v595
      %631 = vmatprep.subr.mxu0 0.0
      %632 = vmatpush1.msra.mxu0 %v596
      %633 = vmatprep.subr.mxu0 0.0
      %634 = vmatpush1.msra.mxu0 %v597
      %635 = vmatprep.subr.mxu0 0.0
      %636 = vmatpush1.msra.mxu0 %v598
      %637 = vmatprep.subr.mxu0 0.0
      %638 = vmatpush1.msra.mxu0 %v599
      %639 = vmatprep.subr.mxu0 0.0
      %640 = vmatpush1.msra.mxu0 %v600
      %641 = vmatprep.subr.mxu0 0.0
      %642 = vmatpush1.msra.mxu0 %v601
      %643 = vmatprep.subr.mxu0 0.0
      %644 = vmatpush1.msra.mxu0 %v602
      %645 = vmatprep.subr.mxu0 0.0
      %646 = vmatpush1.msra.mxu0 %v603
      %647 = vmatprep.subr.mxu0 0.0
      %648 = vmatpush1.msra.mxu0 0.0
      %649 = vmatprep.subr.mxu0 0.0
      %650 = vmatpush1.msra.mxu0 0.0
      %651 = vmatprep.subr.mxu0 0.0
      %652 = vmatpush1.msra.mxu0 0.0
      %653 = vmatprep.subr.mxu0 0.0
      %654 = vmatpush1.msra.mxu0 0.0
      %655 = vmatprep.subr.mxu0 0.0
      %656 = vmatpush1.msra.mxu0 0.0
      %657 = vmatprep.subr.mxu0 0.0
      %658 = vmatpush1.msra.mxu0 0.0
      %659 = vmatprep.subr.mxu0 0.0
      %660 = vmatpush1.msra.mxu0 0.0
      %661 = vmatprep.subr.mxu0 0.0
      %662 = vmatpush1.msra.mxu0 0.0
      %663 = vmatprep.subr.mxu0 0.0
      %664 = vmatpush1.msra.mxu0 0.0
      %665 = vmatprep.subr.mxu0 0.0
      %666 = vmatpush1.msra.mxu0 0.0
      %667 = vmatprep.subr.mxu0 0.0
      %668 = vmatpush1.msra.mxu0 0.0
      %669 = vmatprep.subr.mxu0 0.0
      %670 = vmatpush1.msra.mxu0 0.0
      %671 = vmatprep.subr.mxu0 0.0
      %672 = vmatpush1.msra.mxu0 0.0
      %673 = vmatprep.subr.mxu0 0.0
      %674 = vmatpush1.msra.mxu0 0.0
      %675 = vmatprep.mubr.f32.mxu0 %v606
      %676 = vmatmul.mubr.f32.gmra.mrb[0].mxu0 %v580
      %v677 = vpop.f32.mrb[0].mxu0
      %v678 = vadd.f32 0.0, %v677
      %v679 = vpop.f32.mrb[0].mxu0
      %680 = vmatprep.mubr.f32.mxu0 %v609
      %681 = vmatmul.mubr.f32.gmra.mrb[0].mxu0 %v581
      %v682 = vpop.f32.mrb[0].mxu0
      %v683 = vadd.f32 0.0, %v682
      %v684 = vpop.f32.mrb[0].mxu0
      %685 = vdwg.mxu0
      %v686 = vlaneseq
      %v687 = vshrl.u32 %v686, 7
      %v688 = vsub.s32 1, %v687
      %v689 = vrot.slane %v228, %v688
      %v690 = vadd.f32 %v689, %v678
      %v691 = vadd.f32 %v689, %v683
      %s692 = scalar_lea.vmem %s2, 144
      %v693 = vld [vmem:[%s692] sm:$0xff]
      %v694 = vld [vmem:[%s692 + $0x8] sm:$0xff]
      %v695 = vld [vmem:[%s692 + $0x10] sm:$0xff]
      %v696 = vld [vmem:[%s692 + $0x18] sm:$0xff]
      %v697 = vld [vmem:[%s692 + $0x20] sm:$0xff]
      %v698 = vld [vmem:[%s692 + $0x28] sm:$0xff]
      %v699 = vld [vmem:[%s692 + $0x30] sm:$0xff]
      %v700 = vld [vmem:[%s692 + $0x38] sm:$0xff]
      %v701 = vld [vmem:[%s692 + $0x40] sm:$0xff]
      %v702 = vld [vmem:[%s692 + $0x48] sm:$0xff]
      %v703 = vld [vmem:[%s692 + $0x50] sm:$0xff]
      %v704 = vld [vmem:[%s692 + $0x58] sm:$0xff]
      %v705 = vld [vmem:[%s692 + $0x60] sm:$0xff]
      %v706 = vld [vmem:[%s692 + $0x68] sm:$0xff]
      %v707 = vld [vmem:[%s692 + $0x70] sm:$0xff]
      %v708 = vld [vmem:[%s692 + $0x78] sm:$0xff]
      %v709 = vld [vmem:[%s692 + $0x80] sm:$0xff]
      %v710 = vld [vmem:[%s692 + $0x88] sm:$0xff]
      %v715 = vrot.slane %v580, 1
      %v716 = vrot.slane %v581, 1
      %v717 = vsel %vm346, %v715, %v716
      %v718 = vrot.slane %v583, 1
      %v719 = vrot.slane %v584, 1
      %v720 = vsel %vm346, %v718, %v719
      %v721 = vrot.slane %v582, 1
      %v722 = vsel %vm346, %v716, %v721
      %v723 = vrot.slane %v585, 1
      %v724 = vsel %vm346, %v719, %v723
      %v727 = vsel %vm604, %v720, 0
      %v729 = vsel %vm604, %v724, 0
      %731 = vmatprep.subr.mxu0 0.0
      %732 = vmatpush1.msra.mxu0 %v693
      %733 = vmatprep.subr.mxu0 0.0
      %734 = vmatpush1.msra.mxu0 %v694
      %735 = vmatprep.subr.mxu0 0.0
      %736 = vmatpush1.msra.mxu0 %v695
      %737 = vmatprep.subr.mxu0 0.0
      %738 = vmatpush1.msra.mxu0 %v696
      %739 = vmatprep.subr.mxu0 0.0
      %740 = vmatpush1.msra.mxu0 %v697
      %741 = vmatprep.subr.mxu0 0.0
      %742 = vmatpush1.msra.mxu0 %v698
      %743 = vmatprep.subr.mxu0 0.0
      %744 = vmatpush1.msra.mxu0 %v699
      %745 = vmatprep.subr.mxu0 0.0
      %746 = vmatpush1.msra.mxu0 %v700
      %747 = vmatprep.subr.mxu0 0.0
      %748 = vmatpush1.msra.mxu0 %v701
      %749 = vmatprep.subr.mxu0 0.0
      %750 = vmatpush1.msra.mxu0 %v702
      %751 = vmatprep.subr.mxu0 0.0
      %752 = vmatpush1.msra.mxu0 %v703
      %753 = vmatprep.subr.mxu0 0.0
      %754 = vmatpush1.msra.mxu0 %v704
      %755 = vmatprep.subr.mxu0 0.0
      %756 = vmatpush1.msra.mxu0 %v705
      %757 = vmatprep.subr.mxu0 0.0
      %758 = vmatpush1.msra.mxu0 %v706
      %759 = vmatprep.subr.mxu0 0.0
      %760 = vmatpush1.msra.mxu0 %v707
      %761 = vmatprep.subr.mxu0 0.0
      %762 = vmatpush1.msra.mxu0 %v708
      %763 = vmatprep.subr.mxu0 0.0
      %764 = vmatpush1.msra.mxu0 %v709
      %765 = vmatprep.subr.mxu0 0.0
      %766 = vmatpush1.msra.mxu0 %v710
      %767 = vmatprep.subr.mxu0 0.0
      %768 = vmatpush1.msra.mxu0 0.0
      %769 = vmatprep.subr.mxu0 0.0
      %770 = vmatpush1.msra.mxu0 0.0
      %771 = vmatprep.subr.mxu0 0.0
      %772 = vmatpush1.msra.mxu0 0.0
      %773 = vmatprep.subr.mxu0 0.0
      %774 = vmatpush1.msra.mxu0 0.0
      %775 = vmatprep.subr.mxu0 0.0
      %776 = vmatpush1.msra.mxu0 0.0
      %777 = vmatprep.subr.mxu0 0.0
      %778 = vmatpush1.msra.mxu0 0.0
      %779 = vmatprep.subr.mxu0 0.0
      %780 = vmatpush1.msra.mxu0 0.0
      %781 = vmatprep.subr.mxu0 0.0
      %782 = vmatpush1.msra.mxu0 0.0
      %783 = vmatprep.subr.mxu0 0.0
      %784 = vmatpush1.msra.mxu0 0.0
      %785 = vmatprep.subr.mxu0 0.0
      %786 = vmatpush1.msra.mxu0 0.0
      %787 = vmatprep.subr.mxu0 0.0
      %788 = vmatpush1.msra.mxu0 0.0
      %789 = vmatprep.subr.mxu0 0.0
      %790 = vmatpush1.msra.mxu0 0.0
      %791 = vmatprep.subr.mxu0 0.0
      %792 = vmatpush1.msra.mxu0 0.0
      %793 = vmatprep.subr.mxu0 0.0
      %794 = vmatpush1.msra.mxu0 0.0
      %795 = vmatprep.mubr.f32.mxu0 %v727
      %796 = vmatmul.mubr.f32.gmra.mrb[0].mxu0 %v717
      %v797 = vpop.f32.mrb[0].mxu0
      %v798 = vadd.f32 0.0, %v797
      %v799 = vpop.f32.mrb[0].mxu0
      %800 = vmatprep.mubr.f32.mxu0 %v729
      %801 = vmatmul.mubr.f32.gmra.mrb[0].mxu0 %v722
      %v802 = vpop.f32.mrb[0].mxu0
      %v803 = vadd.f32 0.0, %v802
      %v804 = vpop.f32.mrb[0].mxu0
      %805 = vdwg.mxu0
      %v806 = vadd.f32 %v690, %v798
      %v807 = vadd.f32 %v691, %v803
      %s808 = scalar_lea.vmem %s2, 288
      %v809 = vld [vmem:[%s808] sm:$0xff]
      %v810 = vld [vmem:[%s808 + $0x8] sm:$0xff]
      %v811 = vld [vmem:[%s808 + $0x10] sm:$0xff]
      %v812 = vld [vmem:[%s808 + $0x18] sm:$0xff]
      %v813 = vld [vmem:[%s808 + $0x20] sm:$0xff]
      %v814 = vld [vmem:[%s808 + $0x28] sm:$0xff]
      %v815 = vld [vmem:[%s808 + $0x30] sm:$0xff]
      %v816 = vld [vmem:[%s808 + $0x38] sm:$0xff]
      %v817 = vld [vmem:[%s808 + $0x40] sm:$0xff]
      %v818 = vld [vmem:[%s808 + $0x48] sm:$0xff]
      %v819 = vld [vmem:[%s808 + $0x50] sm:$0xff]
      %v820 = vld [vmem:[%s808 + $0x58] sm:$0xff]
      %v821 = vld [vmem:[%s808 + $0x60] sm:$0xff]
      %v822 = vld [vmem:[%s808 + $0x68] sm:$0xff]
      %v823 = vld [vmem:[%s808 + $0x70] sm:$0xff]
      %v824 = vld [vmem:[%s808 + $0x78] sm:$0xff]
      %v825 = vld [vmem:[%s808 + $0x80] sm:$0xff]
      %v826 = vld [vmem:[%s808 + $0x88] sm:$0xff]
      %v827 = vrot.slane %v580, 2
      %v828 = vrot.slane %v581, 2
      %v829 = vsel %vm443, %v827, %v828
      %v830 = vrot.slane %v583, 2
      %v831 = vrot.slane %v584, 2
      %v832 = vsel %vm443, %v830, %v831
      %v833 = vrot.slane %v582, 2
      %v834 = vsel %vm443, %v828, %v833
      %v835 = vrot.slane %v585, 2
      %v836 = vsel %vm443, %v831, %v835
      %v839 = vsel %vm604, %v832, 0
      %v841 = vsel %vm604, %v836, 0
      %843 = vmatprep.subr.mxu0 0.0
      %844 = vmatpush1.msra.mxu0 %v809
      %845 = vmatprep.subr.mxu0 0.0
      %846 = vmatpush1.msra.mxu0 %v810
      %847 = vmatprep.subr.mxu0 0.0
      %848 = vmatpush1.msra.mxu0 %v811
      %849 = vmatprep.subr.mxu0 0.0
      %850 = vmatpush1.msra.mxu0 %v812
      %851 = vmatprep.subr.mxu0 0.0
      %852 = vmatpush1.msra.mxu0 %v813
      %853 = vmatprep.subr.mxu0 0.0
      %854 = vmatpush1.msra.mxu0 %v814
      %855 = vmatprep.subr.mxu0 0.0
      %856 = vmatpush1.msra.mxu0 %v815
      %857 = vmatprep.subr.mxu0 0.0
      %858 = vmatpush1.msra.mxu0 %v816
      %859 = vmatprep.subr.mxu0 0.0
      %860 = vmatpush1.msra.mxu0 %v817
      %861 = vmatprep.subr.mxu0 0.0
      %862 = vmatpush1.msra.mxu0 %v818
      %863 = vmatprep.subr.mxu0 0.0
      %864 = vmatpush1.msra.mxu0 %v819
      %865 = vmatprep.subr.mxu0 0.0
      %866 = vmatpush1.msra.mxu0 %v820
      %867 = vmatprep.subr.mxu0 0.0
      %868 = vmatpush1.msra.mxu0 %v821
      %869 = vmatprep.subr.mxu0 0.0
      %870 = vmatpush1.msra.mxu0 %v822
      %871 = vmatprep.subr.mxu0 0.0
      %872 = vmatpush1.msra.mxu0 %v823
      %873 = vmatprep.subr.mxu0 0.0
      %874 = vmatpush1.msra.mxu0 %v824
      %875 = vmatprep.subr.mxu0 0.0
      %876 = vmatpush1.msra.mxu0 %v825
      %877 = vmatprep.subr.mxu0 0.0
      %878 = vmatpush1.msra.mxu0 %v826
      %879 = vmatprep.subr.mxu0 0.0
      %880 = vmatpush1.msra.mxu0 0.0
      %881 = vmatprep.subr.mxu0 0.0
      %882 = vmatpush1.msra.mxu0 0.0
      %883 = vmatprep.subr.mxu0 0.0
      %884 = vmatpush1.msra.mxu0 0.0
      %885 = vmatprep.subr.mxu0 0.0
      %886 = vmatpush1.msra.mxu0 0.0
      %887 = vmatprep.subr.mxu0 0.0
      %888 = vmatpush1.msra.mxu0 0.0
      %889 = vmatprep.subr.mxu0 0.0
      %890 = vmatpush1.msra.mxu0 0.0
      %891 = vmatprep.subr.mxu0 0.0
      %892 = vmatpush1.msra.mxu0 0.0
      %893 = vmatprep.subr.mxu0 0.0
      %894 = vmatpush1.msra.mxu0 0.0
      %895 = vmatprep.subr.mxu0 0.0
      %896 = vmatpush1.msra.mxu0 0.0
      %897 = vmatprep.subr.mxu0 0.0
      %898 = vmatpush1.msra.mxu0 0.0
      %899 = vmatprep.subr.mxu0 0.0
      %900 = vmatpush1.msra.mxu0 0.0
      %901 = vmatprep.subr.mxu0 0.0
      %902 = vmatpush1.msra.mxu0 0.0
      %903 = vmatprep.subr.mxu0 0.0
      %904 = vmatpush1.msra.mxu0 0.0
      %905 = vmatprep.subr.mxu0 0.0
      %906 = vmatpush1.msra.mxu0 0.0
      %907 = vmatprep.mubr.f32.mxu0 %v839
      %908 = vmatmul.mubr.f32.gmra.mrb[0].mxu0 %v829
      %v909 = vpop.f32.mrb[0].mxu0
      %v910 = vadd.f32 0.0, %v909
      %v911 = vpop.f32.mrb[0].mxu0
      %912 = vmatprep.mubr.f32.mxu0 %v841
      %913 = vmatmul.mubr.f32.gmra.mrb[0].mxu0 %v834
      %v914 = vpop.f32.mrb[0].mxu0
      %v915 = vadd.f32 0.0, %v914
      %v916 = vpop.f32.mrb[0].mxu0
      %917 = vdwg.mxu0
      %v918 = vadd.f32 %v806, %v910
      %v919 = vadd.f32 %v807, %v915
      %v920 = vld [vmem:[%s3] sm:$0xff]
      %v921 = vld [vmem:[%s3 + $0x8] sm:$0xff]
      %v922 = vld [vmem:[%s3 + $0x10] sm:$0xff]
      %v923 = vld [vmem:[%s3 + $0x18] sm:$0xff]
      %v924 = vld [vmem:[%s3 + $0x20] sm:$0xff]
      %v925 = vld [vmem:[%s3 + $0x28] sm:$0xff]
      %v926 = vld [vmem:[%s3 + $0x30] sm:$0xff]
      %v927 = vld [vmem:[%s3 + $0x38] sm:$0xff]
      %v931 = vrot.slane %v225, 1
      %v932 = vrot.slane %v226, 1
      %v933 = vsel %vm346, %v931, %v932
      %v934 = vrot.slane %v227, 1
      %v935 = vsel %vm346, %v932, %v934
      %936 = vrot.lane.b32.xlu0 %v933, 124
      %v937 = vpop.permute.xlu0 %936
      %938 = vrot.lane.b32.xlu0 %v935, 124
      %v939 = vpop.permute.xlu0 %938
      %vm940 = vcmask 523264
      %v941 = vsel %vm940, %v937, 0
      %v943 = vsel %vm940, %v939, 0
      %945 = vmatprep.subr.mxu0 0.0
      %946 = vmatpush1.msra.mxu0 %v920
      %947 = vmatprep.subr.mxu0 0.0
      %948 = vmatpush1.msra.mxu0 %v921
      %949 = vmatprep.subr.mxu0 0.0
      %950 = vmatpush1.msra.mxu0 %v922
      %951 = vmatprep.subr.mxu0 0.0
      %952 = vmatpush1.msra.mxu0 %v923
      %953 = vmatprep.subr.mxu0 0.0
      %954 = vmatpush1.msra.mxu0 %v924
      %955 = vmatprep.subr.mxu0 0.0
      %956 = vmatpush1.msra.mxu0 %v925
      %957 = vmatprep.subr.mxu0 0.0
      %958 = vmatpush1.msra.mxu0 %v926
      %959 = vmatprep.subr.mxu0 0.0
      %960 = vmatpush1.msra.mxu0 %v927
      %961 = vmatprep.subr.mxu0 0.0
      %962 = vmatpush1.msra.mxu0 0.0
      %963 = vmatprep.subr.mxu0 0.0
      %964 = vmatpush1.msra.mxu0 0.0
      %965 = vmatprep.subr.mxu0 0.0
      %966 = vmatpush1.msra.mxu0 0.0
      %967 = vmatprep.subr.mxu0 0.0
      %968 = vmatpush1.msra.mxu0 0.0
      %969 = vmatprep.subr.mxu0 0.0
      %970 = vmatpush1.msra.mxu0 0.0
      %971 = vmatprep.subr.mxu0 0.0
      %972 = vmatpush1.msra.mxu0 0.0
      %973 = vmatprep.subr.mxu0 0.0
      %974 = vmatpush1.msra.mxu0 0.0
      %975 = vmatprep.subr.mxu0 0.0
      %976 = vmatpush1.msra.mxu0 0.0
      %977 = vmatprep.subr.mxu0 0.0
      %978 = vmatpush1.msra.mxu0 0.0
      %979 = vmatprep.subr.mxu0 0.0
      %980 = vmatpush1.msra.mxu0 0.0
      %981 = vmatprep.subr.mxu0 0.0
      %982 = vmatpush1.msra.mxu0 0.0
      %983 = vmatprep.subr.mxu0 0.0
      %984 = vmatpush1.msra.mxu0 0.0
      %985 = vmatprep.subr.mxu0 0.0
      %986 = vmatpush1.msra.mxu0 0.0
      %987 = vmatprep.subr.mxu0 0.0
      %988 = vmatpush1.msra.mxu0 0.0
      %989 = vmatprep.subr.mxu0 0.0
      %990 = vmatpush1.msra.mxu0 0.0
      %991 = vmatprep.subr.mxu0 0.0
      %992 = vmatpush1.msra.mxu0 0.0
      %993 = vmatprep.subr.mxu0 0.0
      %994 = vmatpush1.msra.mxu0 0.0
      %995 = vmatprep.subr.mxu0 0.0
      %996 = vmatpush1.msra.mxu0 0.0
      %997 = vmatprep.subr.mxu0 0.0
      %998 = vmatpush1.msra.mxu0 0.0
      %999 = vmatprep.subr.mxu0 0.0
      %1000 = vmatpush1.msra.mxu0 0.0
      %1001 = vmatprep.subr.mxu0 0.0
      %1002 = vmatpush1.msra.mxu0 0.0
      %1003 = vmatprep.subr.mxu0 0.0
      %1004 = vmatpush1.msra.mxu0 0.0
      %1005 = vmatprep.subr.mxu0 0.0
      %1006 = vmatpush1.msra.mxu0 0.0
      %1007 = vmatprep.subr.mxu0 0.0
      %1008 = vmatpush1.msra.mxu0 0.0
      %1009 = vmatprep.mubr.f32.mxu0 0.0
      %1010 = vmatmul.mubr.f32.gmra.mrb[0].mxu0 %v941
      %v1011 = vpop.f32.mrb[0].mxu0
      %v1012 = vadd.f32 0.0, %v1011
      %v1013 = vpop.f32.mrb[0].mxu0
      %1014 = vmatprep.mubr.f32.mxu0 0.0
      %1015 = vmatmul.mubr.f32.gmra.mrb[0].mxu0 %v943
      %v1016 = vpop.f32.mrb[0].mxu0
      %v1017 = vadd.f32 0.0, %v1016
      %v1018 = vpop.f32.mrb[0].mxu0
      %1019 = vdwg.mxu0
      %v1020 = vadd.f32 %v918, %v1012
      %v1021 = vadd.f32 %v919, %v1017
      %1022 = vst [vmem:[%s224] sm:$0xff] %v1020
      %1023 = vst [vmem:[%s224 + $0x8] sm:$0xff] %v1021
      %p1024 = scmp.lt.s32.totalorder %s16, 1
      %s1025 = scalar_select %p1024, %s16, 1
      %s1026 = smul.addr %s1025, 2
      %s1027 = smul.addr %s1026, 8
      %s1028 = scalar_lea.vmem %s5, %s1027
      // Predicated region
      $region41: #{residual_block.1} parent=39 // pred_check
        %p1029 = pneg %p144
      $region42: #{residual_block.1} parent=39 // pred_check_branch
        %1031 = sbr.rel (%p1029) target = $region44
      $region43: #{residual_block.1} parent=39 // pred_region
        _
      $region44: #{residual_block.1} parent=39 // pred_fallthru
        _
    $region40: #{residual_block.1} parent=5 // pred_fallthru
      _
    %p1032 = scmp.le.s32.totalorder 2, %s11
    // Predicated region
    $region45: #{residual_block.1} parent=5 // pred_check
      %p1033 = pneg %p1032
    $region46: #{residual_block.1} parent=5 // pred_check_branch
      %1035 = sbr.rel (%p1033) target = $region48
    $region47: #{residual_block.1} parent=5 // pred_region
      %s1036 = ssub.s32 %s11, 2
      // Predicated region
      $region49: #{residual_block.1} parent=47 // pred_check
        %p1037 = pneg %p150
      $region50: #{residual_block.1} parent=47 // pred_check_branch
        %1039 = sbr.rel (%p1037) target = $region52
      $region51: #{residual_block.1} parent=47 // pred_region
        %p1040 = scmp.lt.s32.totalorder %s17, 1
        %s1041 = scalar_select %p1040, %s17, 1
        %s1042 = smul.addr %s1041, 2
        %s1043 = smul.addr %s1042, 8
        %s1044 = scalar_lea.vmem %s5, %s1043
      $region52: #{residual_block.1} parent=47 // pred_fallthru
        _
    $region48: #{residual_block.1} parent=5 // pred_fallthru
      _
  $region6: #{residual_block.1} parent=0 // loop_footer
    %s15 = sadd.s32 1, %s11
  $region7: #{residual_block.1} parent=0 // loop_footer_branch
    %10 = sbr.rel target = $region3
  $region8: #{residual_block.1} parent=0 // loop_exit
    _

</llo_original>
